<compile_context>
chip_gen: v7x
topology: tpu7x:2x2x1
jax: 0.10.0
libtpu: 0.0.40
codegen_flags: <defaults>
</compile_context>

<pallas_src>
import functools

import jax
import jax.numpy as jnp
from jax.experimental import pallas as pl
from jax.experimental.pallas import tpu as pltpu


_VMEM_LIMIT = 32 * 1024 * 1024   # explicit so block choices port to v5e/v6e/v7x
_TILE_ROWS = 1024                # (1024, 128) f32 blocks: near HBM roofline


def _compiler_params(*sem):
    return pltpu.CompilerParams(dimension_semantics=tuple(sem),
                                vmem_limit_bytes=_VMEM_LIMIT)


# ----------------------------------------------------------------------------
# Lane-dense flat reductions (dice sums, feature L1)
# ----------------------------------------------------------------------------

def _flatten_lanes(x):
    """View any tensor as (-1, 128) so every block is lane-dense."""
    flat = x.reshape(-1)
    rem = flat.shape[0] % 128
    if rem:
        flat = jnp.pad(flat, (0, 128 - rem))   # zero pad: contributes 0 to sums
    return flat.reshape(-1, 128)


def _row_tiling(rows):
    tr = rows if rows <= _TILE_ROWS else _TILE_ROWS
    return tr, pl.cdiv(rows, tr)


def _dice_sums_kernel(a_ref, b_ref, ab_ref, sa_ref, sb_ref, *, rows, tile_rows):
    i = pl.program_id(0)

    @pl.when(i == 0)
    def _():
        ab_ref[...] = jnp.zeros_like(ab_ref)
        sa_ref[...] = jnp.zeros_like(sa_ref)
        sb_ref[...] = jnp.zeros_like(sb_ref)

    a = a_ref[...].astype(jnp.float32)
    b = b_ref[...].astype(jnp.float32)
    if rows % tile_rows:   # mask rows of a partially out-of-bounds final block
        ridx = jax.lax.broadcasted_iota(jnp.int32, a.shape, 0) + i * tile_rows
        valid = ridx < rows
        a = jnp.where(valid, a, 0.0)
        b = jnp.where(valid, b, 0.0)

    # Per-step partial reduce to one lane vector -> one vreg store per step;
    # the final cross-lane reduce happens in XLA on a (1, 128) array.
    ab_ref[...] += jnp.sum(a * b, axis=0, keepdims=True)
    sa_ref[...] += jnp.sum(a, axis=0, keepdims=True)
    sb_ref[...] += jnp.sum(b, axis=0, keepdims=True)


def dice_sums(a, b):
    a2, b2 = _flatten_lanes(a), _flatten_lanes(b)
    rows = a2.shape[0]
    tr, g = _row_tiling(rows)
    outs = pl.pallas_call(
        functools.partial(_dice_sums_kernel, rows=rows, tile_rows=tr),
        out_shape=tuple(jax.ShapeDtypeStruct((1, 128), jnp.float32)
                        for _ in range(3)),
        grid=(g,),
        in_specs=[pl.BlockSpec((tr, 128), lambda i: (i, 0)),
                  pl.BlockSpec((tr, 128), lambda i: (i, 0))],
        out_specs=tuple(pl.BlockSpec((1, 128), lambda i: (0, 0))
                        for _ in range(3)),
        compiler_params=_compiler_params("arbitrary"),
    )(a2, b2)
    return tuple(jnp.sum(o) for o in outs)   # (sum(a*b), sum(a), sum(b))


def _l1_sum_kernel(a_ref, b_ref, o_ref, *, rows, tile_rows):
    i = pl.program_id(0)

    @pl.when(i == 0)
    def _():
        o_ref[...] = jnp.zeros_like(o_ref)

    d = jnp.abs(a_ref[...].astype(jnp.float32) - b_ref[...].astype(jnp.float32))
    if rows % tile_rows:
        ridx = jax.lax.broadcasted_iota(jnp.int32, d.shape, 0) + i * tile_rows
        d = jnp.where(ridx < rows, d, 0.0)
    o_ref[...] += jnp.sum(d, axis=0, keepdims=True)


def l1_sum(a, b):
    a2, b2 = _flatten_lanes(a), _flatten_lanes(b)
    rows = a2.shape[0]
    tr, g = _row_tiling(rows)
    out = pl.pallas_call(
        functools.partial(_l1_sum_kernel, rows=rows, tile_rows=tr),
        out_shape=jax.ShapeDtypeStruct((1, 128), jnp.float32),
        grid=(g,),
        in_specs=[pl.BlockSpec((tr, 128), lambda i: (i, 0)),
                  pl.BlockSpec((tr, 128), lambda i: (i, 0))],
        out_specs=pl.BlockSpec((1, 128), lambda i: (0, 0)),
        compiler_params=_compiler_params("arbitrary"),
    )(a2, b2)
    return jnp.sum(out)


# ----------------------------------------------------------------------------
# Fused SSIM + region-aware-L1 + TV over full images (one HBM read)
# ----------------------------------------------------------------------------

def _image_losses_kernel(xo_ref, xg_ref, m_ref, o_ref, *, C, H, W, win,
                         do_ssim, do_tv):
    m = m_ref[0, 0].astype(jnp.float32)             # (H, W)
    pos = jnp.float32(0.0)
    neg = jnp.float32(0.0)
    ssim_s = jnp.float32(0.0)
    tvh = jnp.float32(0.0)
    tvw = jnp.float32(0.0)
    msum = jnp.sum(m) * float(C)                    # mask broadcast over channels

    if do_ssim:
        oh, ow = H - win + 1, W - win + 1
        # Banded summation matrices: box(t) = R @ t @ Cm runs on the idle MXU.
        ri = jax.lax.broadcasted_iota(jnp.int32, (oh, H), 0)
        rj = jax.lax.broadcasted_iota(jnp.int32, (oh, H), 1)
        rmat = jnp.logical_and(rj >= ri, rj < ri + win).astype(jnp.float32)
        ci = jax.lax.broadcasted_iota(jnp.int32, (W, ow), 0)
        cj = jax.lax.broadcasted_iota(jnp.int32, (W, ow), 1)
        cmat = jnp.logical_and(ci >= cj, ci < cj + win).astype(jnp.float32)
        inv = 1.0 / float(win * win)
        c1 = 0.01 ** 2
        c2 = 0.03 ** 2

        def box(t):
            rt = jnp.dot(rmat, t, preferred_element_type=jnp.float32)
            return jnp.dot(rt, cmat, preferred_element_type=jnp.float32)

    for c in range(C):
        x = xo_ref[0, c].astype(jnp.float32)        # (H, W)
        y = xg_ref[0, c].astype(jnp.float32)
        d = jnp.abs(x - y)
        pos = pos + jnp.sum(m * d)
        neg = neg + jnp.sum((1.0 - m) * d)
        if do_tv:
            dh = x[1:, :] - x[:-1, :]
            dw = x[:, 1:] - x[:, :-1]
            tvh = tvh + jnp.sum(dh * dh)
            tvw = tvw + jnp.sum(dw * dw)
        if do_ssim:
            mux = box(x) * inv
            muy = box(y) * inv
            ex2 = box(x * x) * inv
            ey2 = box(y * y) * inv
            exy = box(x * y) * inv
            vx = ex2 - mux * mux
            vy = ey2 - muy * muy
            cxy = exy - mux * muy
            ssim = ((2.0 * mux * muy + c1) * (2.0 * cxy + c2)) / (
                (mux * mux + muy * muy + c1) * (vx + vy + c2))
            ssim_s = ssim_s + jnp.sum(ssim)

    vals = [pos, neg, msum, ssim_s, tvh, tvw,
            jnp.float32(0.0), jnp.float32(0.0)]
    o_ref[0] = jnp.concatenate(
        [jnp.full((1, 128), v, jnp.float32) for v in vals], axis=0)


def image_losses(img_out, img_gt, mask, *, win=7, do_ssim=False, do_tv=False):
    n, c, h, w = img_out.shape
    if do_ssim:
        assert h >= win and w >= win
    out = pl.pallas_call(
        functools.partial(_image_losses_kernel, C=c, H=h, W=w, win=win,
                          do_ssim=do_ssim, do_tv=do_tv),
        out_shape=jax.ShapeDtypeStruct((n, 8, 128), jnp.float32),
        grid=(n,),
        in_specs=[pl.BlockSpec((1, c, h, w), lambda i: (i, 0, 0, 0)),
                  pl.BlockSpec((1, c, h, w), lambda i: (i, 0, 0, 0)),
                  pl.BlockSpec((1, 1, h, w), lambda i: (i, 0, 0, 0))],
        out_specs=pl.BlockSpec((1, 8, 128), lambda i: (i, 0, 0)),
        compiler_params=_compiler_params("parallel"),
    )(img_out.astype(jnp.float32), img_gt.astype(jnp.float32),
      mask.astype(jnp.float32))
    stats = jnp.sum(out[:, :, 0], axis=0)   # per-image partials summed in XLA
    return dict(pos=stats[0], neg=stats[1], msum=stats[2], ssim_sum=stats[3],
                tvh=stats[4], tvw=stats[5])


# ----------------------------------------------------------------------------
# Fused Gram-matrix + L1 (global-similarity) kernel
# ----------------------------------------------------------------------------

def _gram_l1_kernel(fo_ref, fg_ref, o_ref, go_acc, gg_acc, *, hw, tile_hw, c):
    k = pl.program_id(1)

    @pl.when(k == 0)
    def _():
        go_acc[...] = jnp.zeros_like(go_acc)
        gg_acc[...] = jnp.zeros_like(gg_acc)

    fo = fo_ref[0].astype(jnp.bfloat16)   # (tile_hw, c)
    fg = fg_ref[0].astype(jnp.bfloat16)
    if hw % tile_hw:
        ridx = jax.lax.broadcasted_iota(jnp.int32, (tile_hw, c), 0) + k * tile_hw
        valid = ridx < hw
        fo = jnp.where(valid, fo, 0).astype(jnp.bfloat16)
        fg = jnp.where(valid, fg, 0).astype(jnp.bfloat16)

    dims = (((0,), (0,)), ((), ()))       # F^T F over the hw tile (bf16 MXU)
    go_acc[...] += jax.lax.dot_general(fo, fo, dims,
                                       preferred_element_type=jnp.float32)
    gg_acc[...] += jax.lax.dot_general(fg, fg, dims,
                                       preferred_element_type=jnp.float32)

    @pl.when(k == pl.num_programs(1) - 1)
    def _():
        diff = jnp.abs(go_acc[...] - gg_acc[...]) * (1.0 / float(c * hw))
        o_ref[0] = jnp.sum(diff, axis=0, keepdims=True)   # (1, c) lane partial


def gs_loss_fn(feats_out, feats_gt):
    total, count = 0.0, 0
    for fo, fg in zip(feats_out, feats_gt):
        n, h, w, c = fo.shape
        hw = h * w
        tile_hw = hw if hw <= 512 else 512
        fo3 = fo.reshape(n, hw, c)
        fg3 = fg.reshape(n, hw, c)
        out = pl.pallas_call(
            functools.partial(_gram_l1_kernel, hw=hw, tile_hw=tile_hw, c=c),
            out_shape=jax.ShapeDtypeStruct((n, 1, c), jnp.float32),
            grid=(n, pl.cdiv(hw, tile_hw)),
            in_specs=[pl.BlockSpec((1, tile_hw, c), lambda i, k: (i, k, 0)),
                      pl.BlockSpec((1, tile_hw, c), lambda i, k: (i, k, 0))],
            out_specs=pl.BlockSpec((1, 1, c), lambda i, k: (i, 0, 0)),
            scratch_shapes=[pltpu.VMEM((c, c), jnp.float32),
                            pltpu.VMEM((c, c), jnp.float32)],
            compiler_params=_compiler_params("parallel", "arbitrary"),
        )(fo3, fg3)
        total = total + jnp.sum(out) / float(c * c)   # sum of per-sample L1 means
        count += n
    return total / count


# ----------------------------------------------------------------------------
# Synthetic VGG-style extractor (bf16 MXU conv, im2col fused for wide layers)
# ----------------------------------------------------------------------------

def _matmul_bias_kernel(a_ref, b_ref, bias_ref, o_ref, *, relu):
    acc = jnp.dot(a_ref[...].astype(jnp.bfloat16), b_ref[...],
                  preferred_element_type=jnp.float32)
    acc = acc + bias_ref[...]
    if relu:
        acc = jnp.maximum(acc, 0.0)
    o_ref[...] = acc.astype(o_ref.dtype)


def matmul_bias(a, b, bias, relu=False, out_dtype=jnp.bfloat16):
    m, k = a.shape
    _, n_out = b.shape
    tm = 256 if m >= 256 else m           # fixed tile + cdiv grid (no (M,K) block)
    tn = 256 if n_out % 256 == 0 else 128
    assert n_out % tn == 0
    return pl.pallas_call(
        functools.partial(_matmul_bias_kernel, relu=relu),
        out_shape=jax.ShapeDtypeStruct((m, n_out), out_dtype),
        grid=(pl.cdiv(m, tm), n_out // tn),
        in_specs=[pl.BlockSpec((tm, k), lambda i, j: (i, 0)),
                  pl.BlockSpec((k, tn), lambda i, j: (0, j)),
                  pl.BlockSpec((1, tn), lambda i, j: (0, j))],
        out_specs=pl.BlockSpec((tm, tn), lambda i, j: (i, j)),
        compiler_params=_compiler_params("parallel", "parallel"),
    )(a, b.astype(jnp.bfloat16), bias.astype(jnp.float32).reshape(1, n_out))


def _conv3x3_tap_kernel(xp_ref, w_ref, b_ref, o_ref, *, h, w, cin, cout):
    # 3x3 conv with fused im2col: 9 shifted VMEM slices contracted on the MXU.
    x = xp_ref[0].astype(jnp.float32)              # (h+2, w+2, cin)
    acc = jnp.zeros((h * w, cout), jnp.float32)
    for t in range(9):
        dy, dx = t // 3, t % 3
        xs = x[dy:dy + h, dx:dx + w, :].reshape(h * w, cin).astype(jnp.bfloat16)
        wt = w_ref[t * cin:(t + 1) * cin, :]        # (cin, cout) bf16
        acc = acc + jnp.dot(xs, wt, preferred_element_type=jnp.float32)
    acc = jnp.maximum(acc + b_ref[...], 0.0)
    o_ref[0] = acc.astype(o_ref.dtype)


def _conv3x3_relu_fused(x_nhwc, weight, bias):
    n, h, w, cin = x_nhwc.shape
    cout = weight.shape[1]
    xp = jnp.pad(x_nhwc, ((0, 0), (1, 1), (1, 1), (0, 0)))
    # TODO(synk): at realistic resolutions, tile the spatial dim here as well
    # (per-image blocks are fine at the demo sizes and keep halos trivial).
    out = pl.pallas_call(
        functools.partial(_conv3x3_tap_kernel, h=h, w=w, cin=cin, cout=cout),
        out_shape=jax.ShapeDtypeStruct((n, h * w, cout), jnp.bfloat16),
        grid=(n,),
        in_specs=[pl.BlockSpec((1, h + 2, w + 2, cin), lambda i: (i, 0, 0, 0)),
                  pl.BlockSpec((9 * cin, cout), lambda i: (0, 0)),
                  pl.BlockSpec((1, cout), lambda i: (0, 0))],
        out_specs=pl.BlockSpec((1, h * w, cout), lambda i: (i, 0, 0)),
        compiler_params=_compiler_params("parallel"),
    )(xp, weight.astype(jnp.bfloat16),
      bias.astype(jnp.float32).reshape(1, cout))
    return out.reshape(n, h, w, cout)


def conv3x3_relu(x_nhwc, weight, bias):
    n, h, w, cin = x_nhwc.shape
    if cin % 128 == 0 and w % 8 == 0:
        return _conv3x3_relu_fused(x_nhwc, weight, bias)
    # TODO(synk): the narrow 3-channel first layer keeps host-side im2col
    # (patches are only 27 lanes wide); fusing its lane-sparse reshape in-kernel
    # is not worth the lowering risk.
    xp = jnp.pad(x_nhwc, ((0, 0), (1, 1), (1, 1), (0, 0)))
    cols = [xp[:, dy:dy + h, dx:dx + w, :] for dy in range(3) for dx in range(3)]
    patches = jnp.concatenate(cols, axis=-1).reshape(n * h * w, 9 * cin)
    out = matmul_bias(patches, weight, bias, relu=True)
    return out.reshape(n, h, w, -1)


def maxpool2x2(x_nhwc):
    # TODO(synk): tiny 2x2 maxpool kept in JAX glue (not a hot path here).
    n, h, w, c = x_nhwc.shape
    return jnp.max(x_nhwc.reshape(n, h // 2, 2, w // 2, 2, c), axis=(2, 4))


def vgg_extract(image_nchw, params):
    x = jnp.transpose(image_nchw, (0, 2, 3, 1)).astype(jnp.float32)  # NHWC
    f1 = conv3x3_relu(x, params["w1"], params["b1"])                  # bf16
    f2 = conv3x3_relu(maxpool2x2(f1), params["w2"], params["b2"])     # bf16
    return [f1, f2]


# ----------------------------------------------------------------------------
# Individual losses
# ----------------------------------------------------------------------------

def dice_loss_fn(mask_out, mask_gt, smooth=1.0):
    inter, s_out, s_gt = dice_sums(mask_out, mask_gt)
    return 1.0 - (2.0 * inter + smooth) / (s_out + s_gt + smooth)


def vgg_loss_fn(feats_out, feats_gt):
    total = 0.0
    for fo, fg in zip(feats_out, feats_gt):
        total = total + l1_sum(fo, fg) / float(fo.size)
    return total / len(feats_out)


def interp_nearest(x_nchw, size):
    """F.interpolate(mode='nearest') equivalent (cheap gather, JAX glue)."""
    n, c, h, w = x_nchw.shape
    oh, ow = size
    hi = jnp.arange(oh) * h // oh
    wi = jnp.arange(ow) * w // ow
    return x_nchw[:, :, hi[:, None], wi[None, :]]


# ----------------------------------------------------------------------------
# PERTLoss forward
# ----------------------------------------------------------------------------

LOSS_WEIGHTS = dict(dice=1.0, gs=100.0, neg_ssim=1.0, rs=10.0, vgg=0.05, tv=0.1)


def pert_loss_forward(params, mask_out, image_p1_out, image_p2_out,
                      image_out, mask_gt, image_gt, is_last_stage):
    w = LOSS_WEIGHTS
    loss = {}
    loss["dice_loss"] = w["dice"] * dice_loss_fn(mask_out, mask_gt)
    if is_last_stage:
        out_feats = vgg_extract(image_out, params)
        gt_feats = vgg_extract(image_gt, params)
        loss["gs_loss"] = w["gs"] * gs_loss_fn(out_feats, gt_feats)

        n, c, h, wd = image_out.shape
        win = 7
        # One fused pass over the full-resolution images computes the SSIM,
        # region-similarity and TV statistics together (single HBM read).
        full = image_losses(image_out, image_gt, mask_gt, win=win,
                            do_ssim=True, do_tv=True)
        oh, ow = h - win + 1, wd - win + 1
        ssim_mean = full["ssim_sum"] / float(n * c * oh * ow)
        loss["neg_ssim_loss"] = w["neg_ssim"] * (1.0 - ssim_mean)

        p1hw = image_p1_out.shape[2:]
        p2hw = image_p2_out.shape[2:]
        mask_p1_gt = interp_nearest(mask_gt, p1hw)
        image_p1_gt = interp_nearest(image_gt, p1hw)
        mask_p2_gt = interp_nearest(mask_gt, p2hw)
        image_p2_gt = interp_nearest(image_gt, p2hw)
        p1 = image_losses(image_p1_out, image_p1_gt, mask_p1_gt)
        p2 = image_losses(image_p2_out, image_p2_gt, mask_p2_gt)

        alpha, beta, eps = 10.0, 2.0, 1e-6
        rs = 0.0
        for stats, img in ((p1, image_p1_out), (p2, image_p2_out),
                           (full, image_out)):
            count = float(img.size)
            rs = rs + (alpha * stats["pos"] / (stats["msum"] + eps)
                       + beta * stats["neg"] / (count - stats["msum"] + eps))
        loss["rs_loss"] = w["rs"] * rs

        loss["vgg_loss"] = w["vgg"] * vgg_loss_fn(out_feats, gt_feats)

        loss["tv_loss"] = w["tv"] * 2.0 * (
            full["tvh"] / float(c * (h - 1) * wd)
            + full["tvw"] / float(c * h * (wd - 1))) / float(n)
    return loss


# ----------------------------------------------------------------------------
# Main
# ----------------------------------------------------------------------------

if __name__ == "__main__":
    key = jax.random.PRNGKey(0)
    k = jax.random.split(key, 8)

    N, H, W = 2, 16, 16
    mask_out = jax.nn.sigmoid(jax.random.normal(k[0], (N, 1, H, W), jnp.float32))
    mask_gt = (jax.random.uniform(k[1], (N, 1, H, W)) > 0.5).astype(jnp.float32)
    image_out = jax.random.uniform(k[2], (N, 3, H, W), jnp.float32)
    image_gt = jax.random.uniform(k[3], (N, 3, H, W), jnp.float32)
    image_p1_out = jax.random.uniform(k[4], (N, 3, 4, 4), jnp.float32)
    image_p2_out = jax.random.uniform(k[5], (N, 3, 8, 8), jnp.float32)

    # Deterministic synthetic "VGG" extractor weights (128 output channels so
    # all MXU output tiles are lane-dense; real VGG16 widths are >= 64 anyway).
    pkey = jax.random.PRNGKey(42)
    pk = jax.random.split(pkey, 4)
    C1, C2 = 128, 128
    params = dict(
        w1=0.05 * jax.random.normal(pk[0], (9 * 3, C1), jnp.float32),
        b1=0.01 * jax.random.normal(pk[1], (1, C1), jnp.float32),
        w2=0.05 * jax.random.normal(pk[2], (9 * C1, C2), jnp.float32),
        b2=0.01 * jax.random.normal(pk[3], (1, C2), jnp.float32),
    )

    losses = pert_loss_forward(params, mask_out, image_p1_out, image_p2_out,
                               image_out, mask_gt, image_gt, is_last_stage=True)

    for v in losses.values():
        jax.block_until_ready(v)

    print("KERNEL_OK")
</pallas_src>

<mosaic_0001>
module attributes {stable_mosaic.version = 11 : i64} {
  func.func @_dice_sums_kernel(%arg0: i32, %arg1: memref<4x128xf32, #tpu.memory_space<vmem>>, %arg2: memref<4x128xf32, #tpu.memory_space<vmem>>, %arg3: memref<1x128xf32, #tpu.memory_space<vmem>>, %arg4: memref<1x128xf32, #tpu.memory_space<vmem>>, %arg5: memref<1x128xf32, #tpu.memory_space<vmem>>) attributes {dimension_semantics = [#tpu.dimension_semantics<arbitrary>], iteration_bounds = array<i64: 1>, scalar_prefetch = 0 : i64, scratch_operands = 0 : i64, tpu.core_type = #tpu.core_type<tc>, window_params = [{transform_indices = @transform_0, window_bounds = array<i64: 4, 128>}, {transform_indices = @transform_1, window_bounds = array<i64: 4, 128>}, {pipeline_mode = #tpu.pipeline_mode<synchronous>, transform_indices = @transform_2, window_bounds = array<i64: 1, 128>}, {pipeline_mode = #tpu.pipeline_mode<synchronous>, transform_indices = @transform_3, window_bounds = array<i64: 1, 128>}, {pipeline_mode = #tpu.pipeline_mode<synchronous>, transform_indices = @transform_4, window_bounds = array<i64: 1, 128>}]} {
    %c0_i32 = arith.constant 0 : i32
    %0 = arith.cmpi eq, %arg0, %c0_i32 : i32
    %1 = arith.extui %0 : i1 to i32
    %c0_i32_0 = arith.constant 0 : i32
    %2 = arith.cmpi ne, %1, %c0_i32_0 : i32
    scf.if %2 {
      %cst_18 = arith.constant 0.000000e+00 : f32
      %21 = vector.broadcast %cst_18 : f32 to vector<1x128xf32>
      %c0_19 = arith.constant 0 : index
      %c0_20 = arith.constant 0 : index
      %22 = vector.load %arg3[%c0_19, %c0_20] : memref<1x128xf32, #tpu.memory_space<vmem>>, vector<1x128xf32>
      tpu.vector_store %arg3[%c0_19, %c0_20], %21 {strides = array<i32>} : memref<1x128xf32, #tpu.memory_space<vmem>>, vector<1x128xf32>,
      %cst_21 = arith.constant 0.000000e+00 : f32
      %23 = vector.broadcast %cst_21 : f32 to vector<1x128xf32>
      %c0_22 = arith.constant 0 : index
      %c0_23 = arith.constant 0 : index
      %24 = vector.load %arg4[%c0_22, %c0_23] : memref<1x128xf32, #tpu.memory_space<vmem>>, vector<1x128xf32>
      tpu.vector_store %arg4[%c0_22, %c0_23], %23 {strides = array<i32>} : memref<1x128xf32, #tpu.memory_space<vmem>>, vector<1x128xf32>,
      %cst_24 = arith.constant 0.000000e+00 : f32
      %25 = vector.broadcast %cst_24 : f32 to vector<1x128xf32>
      %c0_25 = arith.constant 0 : index
      %c0_26 = arith.constant 0 : index
      %26 = vector.load %arg5[%c0_25, %c0_26] : memref<1x128xf32, #tpu.memory_space<vmem>>, vector<1x128xf32>
      tpu.vector_store %arg5[%c0_25, %c0_26], %25 {strides = array<i32>} : memref<1x128xf32, #tpu.memory_space<vmem>>, vector<1x128xf32>,
    } else {
    }
    %c0 = arith.constant 0 : index
    %c0_1 = arith.constant 0 : index
    %3 = vector.load %arg1[%c0, %c0_1] : memref<4x128xf32, #tpu.memory_space<vmem>>, vector<4x128xf32>
    %c0_2 = arith.constant 0 : index
    %c0_3 = arith.constant 0 : index
    %4 = vector.load %arg2[%c0_2, %c0_3] : memref<4x128xf32, #tpu.memory_space<vmem>>, vector<4x128xf32>
    %c0_4 = arith.constant 0 : index
    %c0_5 = arith.constant 0 : index
    %5 = vector.load %arg3[%c0_4, %c0_5] : memref<1x128xf32, #tpu.memory_space<vmem>>, vector<1x128xf32>
    %6 = arith.mulf %3, %4 : vector<4x128xf32>
    %cst = arith.constant dense<0.000000e+00> : vector<128xf32>
    %7 = vector.multi_reduction <add>, %6, %cst [0] : vector<4x128xf32> to vector<128xf32>
    %8 = vector.shape_cast %7 : vector<128xf32> to vector<1x128xf32>
    %9 = arith.addf %5, %8 : vector<1x128xf32>
    %c0_6 = arith.constant 0 : index
    %c0_7 = arith.constant 0 : index
    %10 = vector.load %arg3[%c0_6, %c0_7] : memref<1x128xf32, #tpu.memory_space<vmem>>, vector<1x128xf32>
    tpu.vector_store %arg3[%c0_6, %c0_7], %9 {strides = array<i32>} : memref<1x128xf32, #tpu.memory_space<vmem>>, vector<1x128xf32>,
    %c0_8 = arith.constant 0 : index
    %c0_9 = arith.constant 0 : index
    %11 = vector.load %arg4[%c0_8, %c0_9] : memref<1x128xf32, #tpu.memory_space<vmem>>, vector<1x128xf32>
    %cst_10 = arith.constant dense<0.000000e+00> : vector<128xf32>
    %12 = vector.multi_reduction <add>, %3, %cst_10 [0] : vector<4x128xf32> to vector<128xf32>
    %13 = vector.shape_cast %12 : vector<128xf32> to vector<1x128xf32>
    %14 = arith.addf %11, %13 : vector<1x128xf32>
    %c0_11 = arith.constant 0 : index
    %c0_12 = arith.constant 0 : index
    %15 = vector.load %arg4[%c0_11, %c0_12] : memref<1x128xf32, #tpu.memory_space<vmem>>, vector<1x128xf32>
    tpu.vector_store %arg4[%c0_11, %c0_12], %14 {strides = array<i32>} : memref<1x128xf32, #tpu.memory_space<vmem>>, vector<1x128xf32>,
    %c0_13 = arith.constant 0 : index
    %c0_14 = arith.constant 0 : index
    %16 = vector.load %arg5[%c0_13, %c0_14] : memref<1x128xf32, #tpu.memory_space<vmem>>, vector<1x128xf32>
    %cst_15 = arith.constant dense<0.000000e+00> : vector<128xf32>
    %17 = vector.multi_reduction <add>, %4, %cst_15 [0] : vector<4x128xf32> to vector<128xf32>
    %18 = vector.shape_cast %17 : vector<128xf32> to vector<1x128xf32>
    %19 = arith.addf %16, %18 : vector<1x128xf32>
    %c0_16 = arith.constant 0 : index
    %c0_17 = arith.constant 0 : index
    %20 = vector.load %arg5[%c0_16, %c0_17] : memref<1x128xf32, #tpu.memory_space<vmem>>, vector<1x128xf32>
    tpu.vector_store %arg5[%c0_16, %c0_17], %19 {strides = array<i32>} : memref<1x128xf32, #tpu.memory_space<vmem>>, vector<1x128xf32>,
    return
  }
  func.func @transform_0(%arg0: i32) -> (i32, i32) {
    %c0_i32 = arith.constant 0 : i32
    %c0_i32_0 = arith.constant 0 : i32
    return %arg0, %c0_i32 : i32, i32
  }
  func.func @transform_1(%arg0: i32) -> (i32, i32) {
    %c0_i32 = arith.constant 0 : i32
    %c0_i32_0 = arith.constant 0 : i32
    return %arg0, %c0_i32 : i32, i32
  }
  func.func @transform_2(%arg0: i32) -> (i32, i32) {
    %c0_i32 = arith.constant 0 : i32
    %c0_i32_0 = arith.constant 0 : i32
    %c0_i32_1 = arith.constant 0 : i32
    return %c0_i32, %c0_i32_0 : i32, i32
  }
  func.func @transform_3(%arg0: i32) -> (i32, i32) {
    %c0_i32 = arith.constant 0 : i32
    %c0_i32_0 = arith.constant 0 : i32
    %c0_i32_1 = arith.constant 0 : i32
    return %c0_i32, %c0_i32_0 : i32, i32
  }
  func.func @transform_4(%arg0: i32) -> (i32, i32) {
    %c0_i32 = arith.constant 0 : i32
    %c0_i32_0 = arith.constant 0 : i32
    %c0_i32_1 = arith.constant 0 : i32
    return %c0_i32, %c0_i32_0 : i32, i32
  }
}

</mosaic_0001>

<llo_original>
// kernel: tpu_custom_call.1
$region0: #{tpu_custom_call.1}
  #allocation0 [shape = 'u32[]', space=smem, size = 0x4, offset = 0x4, fixed_abs, tag = 'smem constant byte address 0x4 - core index']
  #allocation1 [shape = 'u32[144,128]{1,0:T(1,128)}', space=vmem, size = 0x12000, scoped, tag = 'internal scratch']
  %s0 = inlined_call_operand.hbm [shape: f32[4,128], index: 0, kind: input, shape index: {}]
  %s1 = inlined_call_operand.hbm [shape: f32[4,128], index: 1, kind: input, shape index: {}]
  %s2 = inlined_call_operand.hbm [shape: f32[1,128], index: 2, kind: output, shape index: {0}]
  %s3 = inlined_call_operand.hbm [shape: f32[1,128], index: 3, kind: output, shape index: {1}]
  %s4 = inlined_call_operand.hbm [shape: f32[1,128], index: 4, kind: output, shape index: {2}]
  %5 = xla_tuple %s2, %s3, %s4
  %s6 = sld [smem:[#allocation0]]
  $region46: #{tpu_custom_call.1} parent=0
    _
  %s8 = ssub.s32 1, %s6
  %s9 = scalar_select 0, %s8, %s6
  $region1: #{tpu_custom_call.1} parent=0
    #allocation2 [shape = 'u8[2048]{0}', space=vmem, size = 0x800, scoped, tag = 'input window, operand 0, single buffered']
    #allocation3 [shape = 's32[1]{0}', space=sflag, size = 0x4, scoped, tag = 'scoped memory for tpu_custom_call.1']
    #allocation4 [shape = 's32[1]{0}', space=sflag, size = 0x4, scoped, tag = 'scoped memory for tpu_custom_call.1']
    #allocation5 [shape = 'u8[2048]{0}', space=vmem, size = 0x800, scoped, tag = 'input window, operand 1, single buffered']
    #allocation6 [shape = 's32[1]{0}', space=sflag, size = 0x4, scoped, tag = 'scoped memory for tpu_custom_call.1']
    #allocation7 [shape = 'u8[512]{0}', space=vmem, size = 0x400, scoped, tag = 'output window, operand 0, single buffered']
    #allocation8 [shape = 'u8[512]{0}', space=vmem, size = 0x400, scoped, tag = 'output window, operand 1, single buffered']
    #allocation9 [shape = 's32[1]{0}', space=sflag, size = 0x4, scoped, tag = 'scoped memory for tpu_custom_call.1']
    #allocation10 [shape = 'u8[512]{0}', space=vmem, size = 0x400, scoped, tag = 'output window, operand 2, single buffered']
    %10 = vsyncpa [#allocation3], 0
    %11 = vsyncpa [#allocation6], 0
    %12 = vsyncpa [#allocation4], 0
    %13 = vsyncpa [#allocation9], 0
    // Predicated region
    $region2: #{tpu_custom_call.1} parent=1 // pred_check
      _
    $region3: #{tpu_custom_call.1} parent=1 // pred_check_branch
      %15 = sbr.rel (0) target = $region5
    $region4: #{tpu_custom_call.1} parent=1 // pred_region
      %s17 = ssub.s32 64, 64
      %18 = vsyncadd [#allocation3], %s17
      %s20 = sshll.u32 [#allocation2], 4
      %s21 = int_to_ptr.vmem [resolvable:$true] %s20
      %23 = dma.hbm_to_vmem [thread:$0]  %s0, 64, %s21, [#allocation3]
    $region5: #{tpu_custom_call.1} parent=1 // pred_fallthru
      _
    // Predicated region
    $region6: #{tpu_custom_call.1} parent=1 // pred_check
      _
    $region7: #{tpu_custom_call.1} parent=1 // pred_check_branch
      %25 = sbr.rel (0) target = $region9
    $region8: #{tpu_custom_call.1} parent=1 // pred_region
      %s27 = ssub.s32 64, 64
      %28 = vsyncadd [#allocation6], %s27
      %s30 = sshll.u32 [#allocation5], 4
      %s31 = int_to_ptr.vmem [resolvable:$true] %s30
      %33 = dma.hbm_to_vmem [thread:$0]  %s1, 64, %s31, [#allocation6]
    $region9: #{tpu_custom_call.1} parent=1 // pred_fallthru
      _
    // Predicated region
    $region10: #{tpu_custom_call.1} parent=1 // pred_check
      _
    $region11: #{tpu_custom_call.1} parent=1 // pred_check_branch
      %35 = sbr.rel (0) target = $region13
    $region12: #{tpu_custom_call.1} parent=1 // pred_region
      %36 = dma.done [#allocation3], 64
    $region13: #{tpu_custom_call.1} parent=1 // pred_fallthru
      _
    // Predicated region
    $region14: #{tpu_custom_call.1} parent=1 // pred_check
      _
    $region15: #{tpu_custom_call.1} parent=1 // pred_check_branch
      %38 = sbr.rel (0) target = $region17
    $region16: #{tpu_custom_call.1} parent=1 // pred_region
      %39 = dma.done [#allocation6], 64
    $region17: #{tpu_custom_call.1} parent=1 // pred_fallthru
      _
    %p40 = scmp.eq.s32.totalorder 0, 0
    // Predicated region
    $region18: #{tpu_custom_call.1} parent=1 // pred_check
      %p41 = pneg %p40
    $region19: #{tpu_custom_call.1} parent=1 // pred_check_branch
      %43 = sbr.rel (%p41) target = $region21
    $region20: #{tpu_custom_call.1} parent=1 // pred_region
      %44 = vst [vmem:[#allocation7] sm:$0x1] 0.0
      %45 = vst [vmem:[#allocation8] sm:$0x1] 0.0
      %46 = vst [vmem:[#allocation10] sm:$0x1] 0.0
    $region21: #{tpu_custom_call.1} parent=1 // pred_fallthru
      _
    %v47 = vld [vmem:[#allocation2] sm:$0xf]
    %v48 = vld [vmem:[#allocation5] sm:$0xf]
    %v49 = vld [vmem:[#allocation7] sm:$0x1]
    %v50 = vmul.f32 %v47, %v48
    %vm51 = vcmask 1043456
    %v52 = vsel %vm51, %v50, 0.0
    %v53 = vrot.slane %v52, 4
    %v54 = vadd.f32 %v52, %v53
    %v55 = vrot.slane %v54, 2
    %v56 = vadd.f32 %v54, %v55
    %v57 = vrot.slane %v56, 1
    %v58 = vadd.f32 %v56, %v57
    %v59 = vadd.f32 %v49, %v58
    %60 = vst [vmem:[#allocation7] sm:$0x1] %v59
    %v61 = vld [vmem:[#allocation8] sm:$0x1]
    %v62 = vsel %vm51, %v47, 0.0
    %v63 = vrot.slane %v62, 4
    %v64 = vadd.f32 %v62, %v63
    %v65 = vrot.slane %v64, 2
    %v66 = vadd.f32 %v64, %v65
    %v67 = vrot.slane %v66, 1
    %v68 = vadd.f32 %v66, %v67
    %v69 = vadd.f32 %v61, %v68
    %70 = vst [vmem:[#allocation8] sm:$0x1] %v69
    %v71 = vld [vmem:[#allocation10] sm:$0x1]
    %v72 = vsel %vm51, %v48, 0.0
    %v73 = vrot.slane %v72, 4
    %v74 = vadd.f32 %v72, %v73
    %v75 = vrot.slane %v74, 2
    %v76 = vadd.f32 %v74, %v75
    %v77 = vrot.slane %v76, 1
    %v78 = vadd.f32 %v76, %v77
    %v79 = vadd.f32 %v71, %v78
    %80 = vst [vmem:[#allocation10] sm:$0x1] %v79
    // Predicated region
    $region22: #{tpu_custom_call.1} parent=1 // pred_check
      _
    $region23: #{tpu_custom_call.1} parent=1 // pred_check_branch
      %82 = sbr.rel (0) target = $region25
    $region24: #{tpu_custom_call.1} parent=1 // pred_region
      %s84 = ssub.s32 16, 16
      %85 = vsyncadd [#allocation4], %s84
      %s87 = sshll.u32 [#allocation7], 4
      %s88 = int_to_ptr.vmem [resolvable:$true] %s87
      %90 = dma.vmem_to_hbm [thread:$0]  %s88, 16, %s2, [#allocation4]
    $region25: #{tpu_custom_call.1} parent=1 // pred_fallthru
      _
    // Predicated region
    $region26: #{tpu_custom_call.1} parent=1 // pred_check
      _
    $region27: #{tpu_custom_call.1} parent=1 // pred_check_branch
      %92 = sbr.rel (0) target = $region29
    $region28: #{tpu_custom_call.1} parent=1 // pred_region
      %s94 = ssub.s32 16, 16
      %95 = vsyncadd [#allocation9], %s94
      %s97 = sshll.u32 [#allocation8], 4
      %s98 = int_to_ptr.vmem [resolvable:$true] %s97
      %100 = dma.vmem_to_hbm [thread:$0]  %s98, 16, %s3, [#allocation9]
    $region29: #{tpu_custom_call.1} parent=1 // pred_fallthru
      _
    // Predicated region
    $region30: #{tpu_custom_call.1} parent=1 // pred_check
      _
    $region31: #{tpu_custom_call.1} parent=1 // pred_check_branch
      %102 = sbr.rel (0) target = $region33
    $region32: #{tpu_custom_call.1} parent=1 // pred_region
      %s104 = ssub.s32 16, 16
      %105 = vsyncadd [#allocation9], %s104
      %s107 = sshll.u32 [#allocation10], 4
      %s108 = int_to_ptr.vmem [resolvable:$true] %s107
      %110 = dma.vmem_to_hbm [thread:$0]  %s108, 16, %s4, [#allocation9]
    $region33: #{tpu_custom_call.1} parent=1 // pred_fallthru
      _
    // Predicated region
    $region34: #{tpu_custom_call.1} parent=1 // pred_check
      _
    $region35: #{tpu_custom_call.1} parent=1 // pred_check_branch
      %112 = sbr.rel (0) target = $region37
    $region36: #{tpu_custom_call.1} parent=1 // pred_region
      %113 = dma.done [#allocation4], 16
    $region37: #{tpu_custom_call.1} parent=1 // pred_fallthru
      _
    // Predicated region
    $region38: #{tpu_custom_call.1} parent=1 // pred_check
      _
    $region39: #{tpu_custom_call.1} parent=1 // pred_check_branch
      %115 = sbr.rel (0) target = $region41
    $region40: #{tpu_custom_call.1} parent=1 // pred_region
      %116 = dma.done [#allocation9], 16
    $region41: #{tpu_custom_call.1} parent=1 // pred_fallthru
      _
    // Predicated region
    $region42: #{tpu_custom_call.1} parent=1 // pred_check
      _
    $region43: #{tpu_custom_call.1} parent=1 // pred_check_branch
      %118 = sbr.rel (0) target = $region45
    $region44: #{tpu_custom_call.1} parent=1 // pred_region
      %119 = dma.done [#allocation9], 16
    $region45: #{tpu_custom_call.1} parent=1 // pred_fallthru
      _
    %120 = vsyncpa [#allocation3], 1
    %121 = vsyncpa [#allocation6], 1
    %122 = vsyncpa [#allocation4], 1
    %123 = vsyncpa [#allocation9], 1

</llo_original>
